<compile_context>
chip_gen: v5e
topology: v5e:2x2
jax: 0.10.0
libtpu: 0.0.40
codegen_flags: <defaults>
</compile_context>

<pallas_src>
import jax
import jax.numpy as jnp
from jax.experimental import pallas as pl
from jax.experimental.pallas import tpu as pltpu


def _round_up(n, m):
    return ((n + m - 1) // m) * m


_TB = 8  # batch tile = 8 rows -> full 8-sublane f32 occupancy per vector op


def _lstm_fc_kernel(x_ref, wih_ref, whh_ref, b_ref, wfc_ref, bfc_ref, out_ref):
    # x_ref: (T, TB, F) time-major batch tile.
    T, TB, F = x_ref.shape
    H = whh_ref.shape[0]

    # --- Hoisted input projection: one (T*TB, F) @ (F, 4H) MXU matmul + bias. ---
    x_all = x_ref[...].reshape(T * TB, F)                # contiguous leading-dim collapse
    zx = (jnp.dot(x_all, wih_ref[...], preferred_element_type=jnp.float32)
          + b_ref[...])                                  # (T*TB, 4H)

    whh = whh_ref[...]                                   # (H, 4H), VMEM resident
    # TODO(synk): optionally pin W_hh in the MXU across the unrolled chain via
    # pltpu.matmul_push_rhs/matmul_acc_lhs/matmul_pop once a bundle dump confirms
    # Mosaic re-pushes the (32,128) weight tile on every per-step jnp.dot.

    h = jnp.zeros((TB, H), jnp.float32)
    c = jnp.zeros((TB, H), jnp.float32)

    # --- Fully-unrolled recurrence; only h @ W_hh sits on the serial chain. ---
    for t in range(T):
        # Contiguous, tile-aligned static sublane slice (TB == 8): no gather/copy.
        zx_t = zx[t * TB:(t + 1) * TB, :]
        z = zx_t + jnp.dot(h, whh, preferred_element_type=jnp.float32)   # (TB, 4H)
        # Whole-vreg EUP activations, then static lane slices of the results.
        sig = jax.nn.sigmoid(z)
        th = jnp.tanh(z)
        i_g = sig[:, 0 * H:1 * H]
        f_g = sig[:, 1 * H:2 * H]
        g_g = th[:, 2 * H:3 * H]
        o_g = sig[:, 3 * H:4 * H]
        c = f_g * c + i_g * g_g
        h = o_g * jnp.tanh(c)

    # --- Lane-dense FC head: one full unmasked (TB, 128) store. ---
    out_ref[...] = (jnp.dot(h, wfc_ref[...], preferred_element_type=jnp.float32)
                    + bfc_ref[...]).astype(out_ref.dtype)


@jax.jit
def video_rnn_forward(x, w_ih, w_hh, b, w_fc, b_fc):
    B, T, F = x.shape
    H = w_hh.shape[0]
    C = w_fc.shape[1]
    C_pad = _round_up(C, 128)                 # lane-dense output slab
    B_pad = _round_up(B, _TB)                 # fill all 8 f32 sublanes per tile

    # Pad the FC head to 128 lanes so the output store is unmasked.
    w_fc_p = jnp.pad(w_fc, ((0, 0), (0, C_pad - C)))
    b_fc_p = jnp.pad(b_fc, ((0, 0), (0, C_pad - C)))

    # Time-major, batch-padded input (free layout plumbing in the wrapper).
    x_tm = jnp.pad(jnp.swapaxes(x, 0, 1), ((0, 0), (0, B_pad - B), (0, 0)))

    n_tiles = B_pad // _TB

    grid_spec = pltpu.PrefetchScalarGridSpec(
        num_scalar_prefetch=0,
        grid=(n_tiles,),                                   # batch tiles
        in_specs=[
            pl.BlockSpec((T, _TB, F), lambda i: (0, i, 0)),   # x, blocked on batch
            pl.BlockSpec((F, 4 * H), lambda i: (0, 0)),       # W_ih  (resident)
            pl.BlockSpec((H, 4 * H), lambda i: (0, 0)),       # W_hh  (resident)
            pl.BlockSpec((1, 4 * H), lambda i: (0, 0)),       # combined bias
            pl.BlockSpec((H, C_pad), lambda i: (0, 0)),       # W_fc  (padded, resident)
            pl.BlockSpec((1, C_pad), lambda i: (0, 0)),       # b_fc  (padded)
        ],
        out_specs=pl.BlockSpec((_TB, C_pad), lambda i: (i, 0)),
        scratch_shapes=[],
    )

    out_padded = pl.pallas_call(
        _lstm_fc_kernel,
        out_shape=jax.ShapeDtypeStruct((B_pad, C_pad), jnp.float32),
        grid_spec=grid_spec,
        compiler_params=pltpu.CompilerParams(
            dimension_semantics=("parallel",)),            # shards batch tiles on v7x
    )(x_tm, w_ih, w_hh, b, w_fc_p, b_fc_p)

    return out_padded[:B, :C]


def _reference_forward(x, w_ih, w_hh, b, w_fc, b_fc):
    """Pure-JAX reference (same math as PyTorch LSTM + Linear, lax.scan over T)."""
    B, T, F = x.shape
    H = w_hh.shape[0]

    def step(carry, x_t):
        h, c = carry
        z = x_t @ w_ih + h @ w_hh + b[0]
        i = jax.nn.sigmoid(z[:, 0 * H:1 * H])
        f = jax.nn.sigmoid(z[:, 1 * H:2 * H])
        g = jnp.tanh(z[:, 2 * H:3 * H])
        o = jax.nn.sigmoid(z[:, 3 * H:4 * H])
        c = f * c + i * g
        h = o * jnp.tanh(c)
        return (h, c), None

    h0 = jnp.zeros((B, H), jnp.float32)
    c0 = jnp.zeros((B, H), jnp.float32)
    (hT, _), _ = jax.lax.scan(step, (h0, c0), jnp.swapaxes(x, 0, 1))
    return hT @ w_fc + b_fc[0]


if __name__ == "__main__":
    # Small shapes consistent with the module: feature_dim=128, hidden_dim=32,
    # num_layers=1, num_classes=5; batch=2, seq=8.
    B, T, F, H, C = 2, 8, 128, 32, 5

    key = jax.random.PRNGKey(0)
    kx, k1, k2, k3, k4, k5, k6 = jax.random.split(key, 7)
    bound = 1.0 / jnp.sqrt(H)

    x = jax.random.normal(kx, (B, T, F), dtype=jnp.float32)

    # PyTorch stores weight_ih_l0 as (4H, F); we keep the transposed layout (F, 4H).
    w_ih = jax.random.uniform(k1, (F, 4 * H), minval=-bound, maxval=bound,
                              dtype=jnp.float32)
    w_hh = jax.random.uniform(k2, (H, 4 * H), minval=-bound, maxval=bound,
                              dtype=jnp.float32)
    b_ih = jax.random.uniform(k3, (4 * H,), minval=-bound, maxval=bound,
                              dtype=jnp.float32)
    b_hh = jax.random.uniform(k4, (4 * H,), minval=-bound, maxval=bound,
                              dtype=jnp.float32)
    b = (b_ih + b_hh).reshape(1, 4 * H)

    # fc: PyTorch (C, H) weight -> stored as (H, C).
    w_fc = jax.random.uniform(k5, (H, C), minval=-bound, maxval=bound,
                              dtype=jnp.float32)
    b_fc = jax.random.uniform(k6, (1, C), minval=-bound, maxval=bound,
                              dtype=jnp.float32)

    out = video_rnn_forward(x, w_ih, w_hh, b, w_fc, b_fc)
    out = jax.block_until_ready(out)

    ref = _reference_forward(x, w_ih, w_hh, b, w_fc, b_fc)
    assert out.shape == (B, C)
    assert jnp.allclose(out, ref, atol=1e-5, rtol=1e-5), (out, ref)

    print("KERNEL_OK")
</pallas_src>

<mosaic_0001>
module attributes {stable_mosaic.version = 11 : i64} {
  func.func @_lstm_fc_kernel(%arg0: i32, %arg1: memref<8x8x128xf32, #tpu.memory_space<vmem>>, %arg2: memref<128x128xf32, #tpu.memory_space<vmem>>, %arg3: memref<32x128xf32, #tpu.memory_space<vmem>>, %arg4: memref<1x128xf32, #tpu.memory_space<vmem>>, %arg5: memref<32x128xf32, #tpu.memory_space<vmem>>, %arg6: memref<1x128xf32, #tpu.memory_space<vmem>>, %arg7: memref<8x128xf32, #tpu.memory_space<vmem>>) attributes {dimension_semantics = [#tpu.dimension_semantics<parallel>], iteration_bounds = array<i64: 1>, scalar_prefetch = 0 : i64, scratch_operands = 0 : i64, tpu.core_type = #tpu.core_type<tc>, window_params = [{transform_indices = @transform_0, window_bounds = array<i64: 8, 8, 128>}, {pipeline_mode = #tpu.pipeline_mode<synchronous>, transform_indices = @transform_1, window_bounds = array<i64: 128, 128>}, {pipeline_mode = #tpu.pipeline_mode<synchronous>, transform_indices = @transform_2, window_bounds = array<i64: 32, 128>}, {pipeline_mode = #tpu.pipeline_mode<synchronous>, transform_indices = @transform_3, window_bounds = array<i64: 1, 128>}, {pipeline_mode = #tpu.pipeline_mode<synchronous>, transform_indices = @transform_4, window_bounds = array<i64: 32, 128>}, {pipeline_mode = #tpu.pipeline_mode<synchronous>, transform_indices = @transform_5, window_bounds = array<i64: 1, 128>}, {transform_indices = @transform_6, window_bounds = array<i64: 8, 128>}]} {
    %c0 = arith.constant 0 : index
    %c0_0 = arith.constant 0 : index
    %c0_1 = arith.constant 0 : index
    %0 = vector.load %arg1[%c0, %c0_0, %c0_1] : memref<8x8x128xf32, #tpu.memory_space<vmem>>, vector<8x8x128xf32>
    %1 = vector.shape_cast %0 : vector<8x8x128xf32> to vector<64x128xf32>
    %c0_2 = arith.constant 0 : index
    %c0_3 = arith.constant 0 : index
    %2 = vector.load %arg2[%c0_2, %c0_3] : memref<128x128xf32, #tpu.memory_space<vmem>>, vector<128x128xf32>
    %cst = arith.constant dense<0.000000e+00> : vector<64x128xf32>
    %3 = tpu.matmul %1, %2, %cst {dimension_numbers = #tpu.dot_dimension_numbers<[1], [0], [0], [1], [0, 0, 1, 1], [], []>} : vector<64x128xf32>, vector<128x128xf32>, vector<64x128xf32> -> vector<64x128xf32>
    %c0_4 = arith.constant 0 : index
    %c0_5 = arith.constant 0 : index
    %4 = vector.load %arg4[%c0_4, %c0_5] : memref<1x128xf32, #tpu.memory_space<vmem>>, vector<1x128xf32>
    %5 = vector.broadcast %4 : vector<1x128xf32> to vector<64x128xf32>
    %6 = arith.addf %3, %5 : vector<64x128xf32>
    %c0_6 = arith.constant 0 : index
    %c0_7 = arith.constant 0 : index
    %7 = vector.load %arg3[%c0_6, %c0_7] : memref<32x128xf32, #tpu.memory_space<vmem>>, vector<32x128xf32>
    %cst_8 = arith.constant 0.000000e+00 : f32
    %8 = vector.broadcast %cst_8 : f32 to vector<8x32xf32>
    %cst_9 = arith.constant 0.000000e+00 : f32
    %9 = vector.broadcast %cst_9 : f32 to vector<8x32xf32>
    %10 = vector.extract_strided_slice %6 {offsets = [0, 0], sizes = [8, 128], strides = [1, 1]} : vector<64x128xf32> to vector<8x128xf32>
    %cst_10 = arith.constant dense<0.000000e+00> : vector<8x128xf32>
    %11 = tpu.matmul %8, %7, %cst_10 {dimension_numbers = #tpu.dot_dimension_numbers<[1], [0], [0], [1], [0, 0, 1, 1], [], []>} : vector<8x32xf32>, vector<32x128xf32>, vector<8x128xf32> -> vector<8x128xf32>
    %12 = arith.addf %10, %11 : vector<8x128xf32>
    %13 = arith.negf %12 : vector<8x128xf32>
    %14 = math.exp %13 : vector<8x128xf32>
    %cst_11 = arith.constant 1.000000e+00 : f32
    %15 = vector.broadcast %cst_11 : f32 to vector<8x128xf32>
    %16 = arith.addf %15, %14 : vector<8x128xf32>
    %17 = arith.divf %15, %16 : vector<8x128xf32>
    %18 = math.tanh %12 : vector<8x128xf32>
    %19 = vector.extract_strided_slice %17 {offsets = [0, 0], sizes = [8, 32], strides = [1, 1]} : vector<8x128xf32> to vector<8x32xf32>
    %20 = vector.extract_strided_slice %17 {offsets = [0, 32], sizes = [8, 32], strides = [1, 1]} : vector<8x128xf32> to vector<8x32xf32>
    %21 = vector.extract_strided_slice %18 {offsets = [0, 64], sizes = [8, 32], strides = [1, 1]} : vector<8x128xf32> to vector<8x32xf32>
    %22 = vector.extract_strided_slice %17 {offsets = [0, 96], sizes = [8, 32], strides = [1, 1]} : vector<8x128xf32> to vector<8x32xf32>
    %23 = arith.mulf %20, %9 : vector<8x32xf32>
    %24 = arith.mulf %19, %21 : vector<8x32xf32>
    %25 = arith.addf %23, %24 : vector<8x32xf32>
    %26 = math.tanh %25 : vector<8x32xf32>
    %27 = arith.mulf %22, %26 : vector<8x32xf32>
    %28 = vector.extract_strided_slice %6 {offsets = [8, 0], sizes = [8, 128], strides = [1, 1]} : vector<64x128xf32> to vector<8x128xf32>
    %cst_12 = arith.constant dense<0.000000e+00> : vector<8x128xf32>
    %29 = tpu.matmul %27, %7, %cst_12 {dimension_numbers = #tpu.dot_dimension_numbers<[1], [0], [0], [1], [0, 0, 1, 1], [], []>} : vector<8x32xf32>, vector<32x128xf32>, vector<8x128xf32> -> vector<8x128xf32>
    %30 = arith.addf %28, %29 : vector<8x128xf32>
    %31 = arith.negf %30 : vector<8x128xf32>
    %32 = math.exp %31 : vector<8x128xf32>
    %cst_13 = arith.constant 1.000000e+00 : f32
    %33 = vector.broadcast %cst_13 : f32 to vector<8x128xf32>
    %34 = arith.addf %33, %32 : vector<8x128xf32>
    %35 = arith.divf %33, %34 : vector<8x128xf32>
    %36 = math.tanh %30 : vector<8x128xf32>
    %37 = vector.extract_strided_slice %35 {offsets = [0, 0], sizes = [8, 32], strides = [1, 1]} : vector<8x128xf32> to vector<8x32xf32>
    %38 = vector.extract_strided_slice %35 {offsets = [0, 32], sizes = [8, 32], strides = [1, 1]} : vector<8x128xf32> to vector<8x32xf32>
    %39 = vector.extract_strided_slice %36 {offsets = [0, 64], sizes = [8, 32], strides = [1, 1]} : vector<8x128xf32> to vector<8x32xf32>
    %40 = vector.extract_strided_slice %35 {offsets = [0, 96], sizes = [8, 32], strides = [1, 1]} : vector<8x128xf32> to vector<8x32xf32>
    %41 = arith.mulf %38, %25 : vector<8x32xf32>
    %42 = arith.mulf %37, %39 : vector<8x32xf32>
    %43 = arith.addf %41, %42 : vector<8x32xf32>
    %44 = math.tanh %43 : vector<8x32xf32>
    %45 = arith.mulf %40, %44 : vector<8x32xf32>
    %46 = vector.extract_strided_slice %6 {offsets = [16, 0], sizes = [8, 128], strides = [1, 1]} : vector<64x128xf32> to vector<8x128xf32>
    %cst_14 = arith.constant dense<0.000000e+00> : vector<8x128xf32>
    %47 = tpu.matmul %45, %7, %cst_14 {dimension_numbers = #tpu.dot_dimension_numbers<[1], [0], [0], [1], [0, 0, 1, 1], [], []>} : vector<8x32xf32>, vector<32x128xf32>, vector<8x128xf32> -> vector<8x128xf32>
    %48 = arith.addf %46, %47 : vector<8x128xf32>
    %49 = arith.negf %48 : vector<8x128xf32>
    %50 = math.exp %49 : vector<8x128xf32>
    %cst_15 = arith.constant 1.000000e+00 : f32
    %51 = vector.broadcast %cst_15 : f32 to vector<8x128xf32>
    %52 = arith.addf %51, %50 : vector<8x128xf32>
    %53 = arith.divf %51, %52 : vector<8x128xf32>
    %54 = math.tanh %48 : vector<8x128xf32>
    %55 = vector.extract_strided_slice %53 {offsets = [0, 0], sizes = [8, 32], strides = [1, 1]} : vector<8x128xf32> to vector<8x32xf32>
    %56 = vector.extract_strided_slice %53 {offsets = [0, 32], sizes = [8, 32], strides = [1, 1]} : vector<8x128xf32> to vector<8x32xf32>
    %57 = vector.extract_strided_slice %54 {offsets = [0, 64], sizes = [8, 32], strides = [1, 1]} : vector<8x128xf32> to vector<8x32xf32>
    %58 = vector.extract_strided_slice %53 {offsets = [0, 96], sizes = [8, 32], strides = [1, 1]} : vector<8x128xf32> to vector<8x32xf32>
    %59 = arith.mulf %56, %43 : vector<8x32xf32>
    %60 = arith.mulf %55, %57 : vector<8x32xf32>
    %61 = arith.addf %59, %60 : vector<8x32xf32>
    %62 = math.tanh %61 : vector<8x32xf32>
    %63 = arith.mulf %58, %62 : vector<8x32xf32>
    %64 = vector.extract_strided_slice %6 {offsets = [24, 0], sizes = [8, 128], strides = [1, 1]} : vector<64x128xf32> to vector<8x128xf32>
    %cst_16 = arith.constant dense<0.000000e+00> : vector<8x128xf32>
    %65 = tpu.matmul %63, %7, %cst_16 {dimension_numbers = #tpu.dot_dimension_numbers<[1], [0], [0], [1], [0, 0, 1, 1], [], []>} : vector<8x32xf32>, vector<32x128xf32>, vector<8x128xf32> -> vector<8x128xf32>
    %66 = arith.addf %64, %65 : vector<8x128xf32>
    %67 = arith.negf %66 : vector<8x128xf32>
    %68 = math.exp %67 : vector<8x128xf32>
    %cst_17 = arith.constant 1.000000e+00 : f32
    %69 = vector.broadcast %cst_17 : f32 to vector<8x128xf32>
    %70 = arith.addf %69, %68 : vector<8x128xf32>
    %71 = arith.divf %69, %70 : vector<8x128xf32>
    %72 = math.tanh %66 : vector<8x128xf32>
    %73 = vector.extract_strided_slice %71 {offsets = [0, 0], sizes = [8, 32], strides = [1, 1]} : vector<8x128xf32> to vector<8x32xf32>
    %74 = vector.extract_strided_slice %71 {offsets = [0, 32], sizes = [8, 32], strides = [1, 1]} : vector<8x128xf32> to vector<8x32xf32>
    %75 = vector.extract_strided_slice %72 {offsets = [0, 64], sizes = [8, 32], strides = [1, 1]} : vector<8x128xf32> to vector<8x32xf32>
    %76 = vector.extract_strided_slice %71 {offsets = [0, 96], sizes = [8, 32], strides = [1, 1]} : vector<8x128xf32> to vector<8x32xf32>
    %77 = arith.mulf %74, %61 : vector<8x32xf32>
    %78 = arith.mulf %73, %75 : vector<8x32xf32>
    %79 = arith.addf %77, %78 : vector<8x32xf32>
    %80 = math.tanh %79 : vector<8x32xf32>
    %81 = arith.mulf %76, %80 : vector<8x32xf32>
    %82 = vector.extract_strided_slice %6 {offsets = [32, 0], sizes = [8, 128], strides = [1, 1]} : vector<64x128xf32> to vector<8x128xf32>
    %cst_18 = arith.constant dense<0.000000e+00> : vector<8x128xf32>
    %83 = tpu.matmul %81, %7, %cst_18 {dimension_numbers = #tpu.dot_dimension_numbers<[1], [0], [0], [1], [0, 0, 1, 1], [], []>} : vector<8x32xf32>, vector<32x128xf32>, vector<8x128xf32> -> vector<8x128xf32>
    %84 = arith.addf %82, %83 : vector<8x128xf32>
    %85 = arith.negf %84 : vector<8x128xf32>
    %86 = math.exp %85 : vector<8x128xf32>
    %cst_19 = arith.constant 1.000000e+00 : f32
    %87 = vector.broadcast %cst_19 : f32 to vector<8x128xf32>
    %88 = arith.addf %87, %86 : vector<8x128xf32>
    %89 = arith.divf %87, %88 : vector<8x128xf32>
    %90 = math.tanh %84 : vector<8x128xf32>
    %91 = vector.extract_strided_slice %89 {offsets = [0, 0], sizes = [8, 32], strides = [1, 1]} : vector<8x128xf32> to vector<8x32xf32>
    %92 = vector.extract_strided_slice %89 {offsets = [0, 32], sizes = [8, 32], strides = [1, 1]} : vector<8x128xf32> to vector<8x32xf32>
    %93 = vector.extract_strided_slice %90 {offsets = [0, 64], sizes = [8, 32], strides = [1, 1]} : vector<8x128xf32> to vector<8x32xf32>
    %94 = vector.extract_strided_slice %89 {offsets = [0, 96], sizes = [8, 32], strides = [1, 1]} : vector<8x128xf32> to vector<8x32xf32>
    %95 = arith.mulf %92, %79 : vector<8x32xf32>
    %96 = arith.mulf %91, %93 : vector<8x32xf32>
    %97 = arith.addf %95, %96 : vector<8x32xf32>
    %98 = math.tanh %97 : vector<8x32xf32>
    %99 = arith.mulf %94, %98 : vector<8x32xf32>
    %100 = vector.extract_strided_slice %6 {offsets = [40, 0], sizes = [8, 128], strides = [1, 1]} : vector<64x128xf32> to vector<8x128xf32>
    %cst_20 = arith.constant dense<0.000000e+00> : vector<8x128xf32>
    %101 = tpu.matmul %99, %7, %cst_20 {dimension_numbers = #tpu.dot_dimension_numbers<[1], [0], [0], [1], [0, 0, 1, 1], [], []>} : vector<8x32xf32>, vector<32x128xf32>, vector<8x128xf32> -> vector<8x128xf32>
    %102 = arith.addf %100, %101 : vector<8x128xf32>
    %103 = arith.negf %102 : vector<8x128xf32>
    %104 = math.exp %103 : vector<8x128xf32>
    %cst_21 = arith.constant 1.000000e+00 : f32
    %105 = vector.broadcast %cst_21 : f32 to vector<8x128xf32>
    %106 = arith.addf %105, %104 : vector<8x128xf32>
    %107 = arith.divf %105, %106 : vector<8x128xf32>
    %108 = math.tanh %102 : vector<8x128xf32>
    %109 = vector.extract_strided_slice %107 {offsets = [0, 0], sizes = [8, 32], strides = [1, 1]} : vector<8x128xf32> to vector<8x32xf32>
    %110 = vector.extract_strided_slice %107 {offsets = [0, 32], sizes = [8, 32], strides = [1, 1]} : vector<8x128xf32> to vector<8x32xf32>
    %111 = vector.extract_strided_slice %108 {offsets = [0, 64], sizes = [8, 32], strides = [1, 1]} : vector<8x128xf32> to vector<8x32xf32>
    %112 = vector.extract_strided_slice %107 {offsets = [0, 96], sizes = [8, 32], strides = [1, 1]} : vector<8x128xf32> to vector<8x32xf32>
    %113 = arith.mulf %110, %97 : vector<8x32xf32>
    %114 = arith.mulf %109, %111 : vector<8x32xf32>
    %115 = arith.addf %113, %114 : vector<8x32xf32>
    %116 = math.tanh %115 : vector<8x32xf32>
    %117 = arith.mulf %112, %116 : vector<8x32xf32>
    %118 = vector.extract_strided_slice %6 {offsets = [48, 0], sizes = [8, 128], strides = [1, 1]} : vector<64x128xf32> to vector<8x128xf32>
    %cst_22 = arith.constant dense<0.000000e+00> : vector<8x128xf32>
    %119 = tpu.matmul %117, %7, %cst_22 {dimension_numbers = #tpu.dot_dimension_numbers<[1], [0], [0], [1], [0, 0, 1, 1], [], []>} : vector<8x32xf32>, vector<32x128xf32>, vector<8x128xf32> -> vector<8x128xf32>
    %120 = arith.addf %118, %119 : vector<8x128xf32>
    %121 = arith.negf %120 : vector<8x128xf32>
    %122 = math.exp %121 : vector<8x128xf32>
    %cst_23 = arith.constant 1.000000e+00 : f32
    %123 = vector.broadcast %cst_23 : f32 to vector<8x128xf32>
    %124 = arith.addf %123, %122 : vector<8x128xf32>
    %125 = arith.divf %123, %124 : vector<8x128xf32>
    %126 = math.tanh %120 : vector<8x128xf32>
    %127 = vector.extract_strided_slice %125 {offsets = [0, 0], sizes = [8, 32], strides = [1, 1]} : vector<8x128xf32> to vector<8x32xf32>
    %128 = vector.extract_strided_slice %125 {offsets = [0, 32], sizes = [8, 32], strides = [1, 1]} : vector<8x128xf32> to vector<8x32xf32>
    %129 = vector.extract_strided_slice %126 {offsets = [0, 64], sizes = [8, 32], strides = [1, 1]} : vector<8x128xf32> to vector<8x32xf32>
    %130 = vector.extract_strided_slice %125 {offsets = [0, 96], sizes = [8, 32], strides = [1, 1]} : vector<8x128xf32> to vector<8x32xf32>
    %131 = arith.mulf %128, %115 : vector<8x32xf32>
    %132 = arith.mulf %127, %129 : vector<8x32xf32>
    %133 = arith.addf %131, %132 : vector<8x32xf32>
    %134 = math.tanh %133 : vector<8x32xf32>
    %135 = arith.mulf %130, %134 : vector<8x32xf32>
    %136 = vector.extract_strided_slice %6 {offsets = [56, 0], sizes = [8, 128], strides = [1, 1]} : vector<64x128xf32> to vector<8x128xf32>
    %cst_24 = arith.constant dense<0.000000e+00> : vector<8x128xf32>
    %137 = tpu.matmul %135, %7, %cst_24 {dimension_numbers = #tpu.dot_dimension_numbers<[1], [0], [0], [1], [0, 0, 1, 1], [], []>} : vector<8x32xf32>, vector<32x128xf32>, vector<8x128xf32> -> vector<8x128xf32>
    %138 = arith.addf %136, %137 : vector<8x128xf32>
    %139 = arith.negf %138 : vector<8x128xf32>
    %140 = math.exp %139 : vector<8x128xf32>
    %cst_25 = arith.constant 1.000000e+00 : f32
    %141 = vector.broadcast %cst_25 : f32 to vector<8x128xf32>
    %142 = arith.addf %141, %140 : vector<8x128xf32>
    %143 = arith.divf %141, %142 : vector<8x128xf32>
    %144 = math.tanh %138 : vector<8x128xf32>
    %145 = vector.extract_strided_slice %143 {offsets = [0, 0], sizes = [8, 32], strides = [1, 1]} : vector<8x128xf32> to vector<8x32xf32>
    %146 = vector.extract_strided_slice %143 {offsets = [0, 32], sizes = [8, 32], strides = [1, 1]} : vector<8x128xf32> to vector<8x32xf32>
    %147 = vector.extract_strided_slice %144 {offsets = [0, 64], sizes = [8, 32], strides = [1, 1]} : vector<8x128xf32> to vector<8x32xf32>
    %148 = vector.extract_strided_slice %143 {offsets = [0, 96], sizes = [8, 32], strides = [1, 1]} : vector<8x128xf32> to vector<8x32xf32>
    %149 = arith.mulf %146, %133 : vector<8x32xf32>
    %150 = arith.mulf %145, %147 : vector<8x32xf32>
    %151 = arith.addf %149, %150 : vector<8x32xf32>
    %152 = math.tanh %151 : vector<8x32xf32>
    %153 = arith.mulf %148, %152 : vector<8x32xf32>
    %c0_26 = arith.constant 0 : index
    %c0_27 = arith.constant 0 : index
    %154 = vector.load %arg5[%c0_26, %c0_27] : memref<32x128xf32, #tpu.memory_space<vmem>>, vector<32x128xf32>
    %cst_28 = arith.constant dense<0.000000e+00> : vector<8x128xf32>
    %155 = tpu.matmul %153, %154, %cst_28 {dimension_numbers = #tpu.dot_dimension_numbers<[1], [0], [0], [1], [0, 0, 1, 1], [], []>} : vector<8x32xf32>, vector<32x128xf32>, vector<8x128xf32> -> vector<8x128xf32>
    %c0_29 = arith.constant 0 : index
    %c0_30 = arith.constant 0 : index
    %156 = vector.load %arg6[%c0_29, %c0_30] : memref<1x128xf32, #tpu.memory_space<vmem>>, vector<1x128xf32>
    %157 = vector.broadcast %156 : vector<1x128xf32> to vector<8x128xf32>
    %158 = arith.addf %155, %157 : vector<8x128xf32>
    %c0_31 = arith.constant 0 : index
    %c0_32 = arith.constant 0 : index
    %159 = vector.load %arg7[%c0_31, %c0_32] : memref<8x128xf32, #tpu.memory_space<vmem>>, vector<8x128xf32>
    tpu.vector_store %arg7[%c0_31, %c0_32], %158 {strides = array<i32>} : memref<8x128xf32, #tpu.memory_space<vmem>>, vector<8x128xf32>,
    return
  }
  func.func @transform_0(%arg0: i32) -> (i32, i32, i32) {
    %c0_i32 = arith.constant 0 : i32
    %c0_i32_0 = arith.constant 0 : i32
    %c0_i32_1 = arith.constant 0 : i32
    return %c0_i32, %arg0, %c0_i32_0 : i32, i32, i32
  }
  func.func @transform_1(%arg0: i32) -> (i32, i32) {
    %c0_i32 = arith.constant 0 : i32
    %c0_i32_0 = arith.constant 0 : i32
    %c0_i32_1 = arith.constant 0 : i32
    return %c0_i32, %c0_i32_0 : i32, i32
  }
  func.func @transform_2(%arg0: i32) -> (i32, i32) {
    %c0_i32 = arith.constant 0 : i32
    %c0_i32_0 = arith.constant 0 : i32
    %c0_i32_1 = arith.constant 0 : i32
    return %c0_i32, %c0_i32_0 : i32, i32
  }
  func.func @transform_3(%arg0: i32) -> (i32, i32) {
    %c0_i32 = arith.constant 0 : i32
    %c0_i32_0 = arith.constant 0 : i32
    %c0_i32_1 = arith.constant 0 : i32
    return %c0_i32, %c0_i32_0 : i32, i32
  }
  func.func @transform_4(%arg0: i32) -> (i32, i32) {
    %c0_i32 = arith.constant 0 : i32
    %c0_i32_0 = arith.constant 0 : i32
    %c0_i32_1 = arith.constant 0 : i32
    return %c0_i32, %c0_i32_0 : i32, i32
  }
  func.func @transform_5(%arg0: i32) -> (i32, i32) {
    %c0_i32 = arith.constant 0 : i32
    %c0_i32_0 = arith.constant 0 : i32
    %c0_i32_1 = arith.constant 0 : i32
    return %c0_i32, %c0_i32_0 : i32, i32
  }
  func.func @transform_6(%arg0: i32) -> (i32, i32) {
    %c0_i32 = arith.constant 0 : i32
    %c0_i32_0 = arith.constant 0 : i32
    return %arg0, %c0_i32 : i32, i32
  }
}

</mosaic_0001>

<llo_original>
// kernel: video_rnn_forward.1
$region0: #{video_rnn_forward.1}
  #allocation0 [shape = 'u32[]', space=smem, size = 0x4, offset = 0x4, fixed_abs, tag = 'smem constant byte address 0x4 - core index']
  #allocation1 [shape = 'u32[72,128]{1,0:T(1,128)}', space=vmem, size = 0x9000, scoped, tag = 'internal scratch']
  %s0 = inlined_call_operand.vmem [shape: f32[8,8,128], index: 0, kind: input, shape index: {}]
  %s1 = inlined_call_operand.vmem [shape: f32[128,128], index: 1, kind: input, shape index: {}]
  %s2 = inlined_call_operand.vmem [shape: f32[32,128], index: 2, kind: input, shape index: {}]
  %s3 = inlined_call_operand.vmem [shape: f32[1,128], index: 3, kind: input, shape index: {}]
  %s4 = inlined_call_operand.vmem [shape: f32[32,128], index: 4, kind: input, shape index: {}]
  %s5 = inlined_call_operand.vmem [shape: f32[1,128], index: 5, kind: input, shape index: {}]
  %s6 = inlined_call_operand.vmem [shape: f32[8,128], index: 6, kind: output, shape index: {}]
  %s7 = sld [smem:[#allocation0]]
  $region34: #{video_rnn_forward.1} parent=0
    _
  %s9 = ssub.s32 1, %s7
  %s10 = scalar_select 0, %s9, %s7
  // Predicated region
  $region2: #{video_rnn_forward.1} parent=0 // pred_check
    _
  $region3: #{video_rnn_forward.1} parent=0 // pred_check_branch
    %12 = sbr.rel (0) target = $region5
  $region4: #{video_rnn_forward.1} parent=0 // pred_region
    _
  $region5: #{video_rnn_forward.1} parent=0 // pred_fallthru
    _
  // Predicated region
  $region6: #{video_rnn_forward.1} parent=0 // pred_check
    _
  $region7: #{video_rnn_forward.1} parent=0 // pred_check_branch
    %14 = sbr.rel (0) target = $region9
  $region8: #{video_rnn_forward.1} parent=0 // pred_region
    _
  $region9: #{video_rnn_forward.1} parent=0 // pred_fallthru
    _
  // Predicated region
  $region10: #{video_rnn_forward.1} parent=0 // pred_check
    _
  $region11: #{video_rnn_forward.1} parent=0 // pred_check_branch
    %16 = sbr.rel (0) target = $region13
  $region12: #{video_rnn_forward.1} parent=0 // pred_region
    _
  $region13: #{video_rnn_forward.1} parent=0 // pred_fallthru
    _
  // Predicated region
  $region14: #{video_rnn_forward.1} parent=0 // pred_check
    _
  $region15: #{video_rnn_forward.1} parent=0 // pred_check_branch
    %18 = sbr.rel (0) target = $region17
  $region16: #{video_rnn_forward.1} parent=0 // pred_region
    _
  $region17: #{video_rnn_forward.1} parent=0 // pred_fallthru
    _
  // Predicated region
  $region18: #{video_rnn_forward.1} parent=0 // pred_check
    _
  $region19: #{video_rnn_forward.1} parent=0 // pred_check_branch
    %20 = sbr.rel (0) target = $region21
  $region20: #{video_rnn_forward.1} parent=0 // pred_region
    _
  $region21: #{video_rnn_forward.1} parent=0 // pred_fallthru
    _
  // Predicated region
  $region22: #{video_rnn_forward.1} parent=0 // pred_check
    _
  $region23: #{video_rnn_forward.1} parent=0 // pred_check_branch
    %22 = sbr.rel (0) target = $region25
  $region24: #{video_rnn_forward.1} parent=0 // pred_region
    _
  $region25: #{video_rnn_forward.1} parent=0 // pred_fallthru
    _
  %v23 = vld [vmem:[%s0] sm:$0xff]
  %v24 = vld [vmem:[%s0 + $0x8] sm:$0xff]
  %v25 = vld [vmem:[%s0 + $0x10] sm:$0xff]
  %v26 = vld [vmem:[%s0 + $0x18] sm:$0xff]
  %v27 = vld [vmem:[%s0 + $0x20] sm:$0xff]
  %v28 = vld [vmem:[%s0 + $0x28] sm:$0xff]
  %v29 = vld [vmem:[%s0 + $0x30] sm:$0xff]
  %v30 = vld [vmem:[%s0 + $0x38] sm:$0xff]
  %v31 = vld [vmem:[%s1] sm:$0xff]
  %v32 = vld [vmem:[%s1 + $0x8] sm:$0xff]
  %v33 = vld [vmem:[%s1 + $0x10] sm:$0xff]
  %v34 = vld [vmem:[%s1 + $0x18] sm:$0xff]
  %v35 = vld [vmem:[%s1 + $0x20] sm:$0xff]
  %v36 = vld [vmem:[%s1 + $0x28] sm:$0xff]
  %v37 = vld [vmem:[%s1 + $0x30] sm:$0xff]
  %v38 = vld [vmem:[%s1 + $0x38] sm:$0xff]
  %v39 = vld [vmem:[%s1 + $0x40] sm:$0xff]
  %v40 = vld [vmem:[%s1 + $0x48] sm:$0xff]
  %v41 = vld [vmem:[%s1 + $0x50] sm:$0xff]
  %v42 = vld [vmem:[%s1 + $0x58] sm:$0xff]
  %v43 = vld [vmem:[%s1 + $0x60] sm:$0xff]
  %v44 = vld [vmem:[%s1 + $0x68] sm:$0xff]
  %v45 = vld [vmem:[%s1 + $0x70] sm:$0xff]
  %v46 = vld [vmem:[%s1 + $0x78] sm:$0xff]
  %v47 = vld [vmem:[%s3] sm:$0x1]
  %v49 = vperm.slane %v47, 0
  %51 = vmatpush.msra.mxu0 %v46
  %52 = vmatpush.msra.mxu0 %v45
  %53 = vmatpush.msra.mxu0 %v44
  %54 = vmatpush.msra.mxu0 %v43
  %55 = vmatpush.msra.mxu0 %v42
  %56 = vmatpush.msra.mxu0 %v41
  %57 = vmatpush.msra.mxu0 %v40
  %58 = vmatpush.msra.mxu0 %v39
  %59 = vmatpush.msra.mxu0 %v38
  %60 = vmatpush.msra.mxu0 %v37
  %61 = vmatpush.msra.mxu0 %v36
  %62 = vmatpush.msra.mxu0 %v35
  %63 = vmatpush.msra.mxu0 %v34
  %64 = vmatpush.msra.mxu0 %v33
  %65 = vmatpush.msra.mxu0 %v32
  %66 = vmatpush.msra.mxu0 %v31
  %67 = vmatmul.f32.gmra.mxu0 %v23
  %v68 = vpop.f32.mrf.mxu0
  %v69 = vadd.f32 %v49, %v68
  %70 = vmatmul.f32.gmra.mxu0 %v24
  %v71 = vpop.f32.mrf.mxu0
  %v72 = vadd.f32 %v49, %v71
  %73 = vmatmul.f32.gmra.mxu0 %v25
  %v74 = vpop.f32.mrf.mxu0
  %v75 = vadd.f32 %v49, %v74
  %76 = vmatmul.f32.gmra.mxu0 %v26
  %v77 = vpop.f32.mrf.mxu0
  %v78 = vadd.f32 %v49, %v77
  %79 = vmatmul.f32.gmra.mxu0 %v27
  %v80 = vpop.f32.mrf.mxu0
  %v81 = vadd.f32 %v49, %v80
  %82 = vmatmul.f32.gmra.mxu0 %v28
  %v83 = vpop.f32.mrf.mxu0
  %v84 = vadd.f32 %v49, %v83
  %85 = vmatmul.f32.gmra.mxu0 %v29
  %v86 = vpop.f32.mrf.mxu0
  %v87 = vadd.f32 %v49, %v86
  %88 = vmatmul.f32.gmra.mxu0 %v30
  %v89 = vpop.f32.mrf.mxu0
  %v90 = vadd.f32 %v49, %v89
  %91 = vdwg.mxu0
  %v92 = vld [vmem:[%s2] sm:$0xff]
  %v93 = vld [vmem:[%s2 + $0x8] sm:$0xff]
  %v94 = vld [vmem:[%s2 + $0x10] sm:$0xff]
  %v95 = vld [vmem:[%s2 + $0x18] sm:$0xff]
  %vm96 = vcmask 261120
  %v98 = vsel %vm96, 0.0, 0
  %100 = vmatpush.msra.mxu0 0.0
  %101 = vmatpush.msra.mxu0 0.0
  %102 = vmatpush.msra.mxu0 0.0
  %103 = vmatpush.msra.mxu0 0.0
  %104 = vmatpush.msra.mxu0 0.0
  %105 = vmatpush.msra.mxu0 0.0
  %106 = vmatpush.msra.mxu0 0.0
  %107 = vmatpush.msra.mxu0 0.0
  %108 = vmatpush.msra.mxu0 0.0
  %109 = vmatpush.msra.mxu0 0.0
  %110 = vmatpush.msra.mxu0 0.0
  %111 = vmatpush.msra.mxu0 0.0
  %112 = vmatpush.msra.mxu0 %v95
  %113 = vmatpush.msra.mxu0 %v94
  %114 = vmatpush.msra.mxu0 %v93
  %115 = vmatpush.msra.mxu0 %v92
  %116 = vmatmul.f32.gmra.mxu0 %v98
  %v117 = vpop.f32.mrf.mxu0
  %v118 = vadd.f32 0.0, %v117
  %119 = vdwg.mxu0
  %v120 = vadd.f32 %v69, %v118
  %v121 = vxor.u32 %v120, 2147483648
  %v122 = vmul.f32 %v121, 1.442695
  %v123 = vpow.pop %v122
  %v124 = vadd.f32 %v123, 1.0
  %v125 = vrcp.pop %v124
  %v126 = vmul.f32 %v124, %v125
  %v127 = vsub.f32 1.0, %v126
  %v128 = vmul.f32 %v125, %v127
  %v129 = vadd.f32 %v125, %v128
  %vm130 = vweird.f32 %v124
  %vm131 = vweird.f32 %v125
  %vm132 = vmor %vm130, %vm131
  %v133 = vsel %vm132, %v125, %v129
  %v134 = vand.u32 2147483647, %v124
  %vm135 = vcmp.eq.f32.partialorder %v134, 8.507059e+37
  %v136 = vand.u32 %v124, 2147483648
  %v137 = vor.u32 1.1754944e-38, %v136
  %v138 = vsel %vm135, %v137, %v133
  %v139 = vmul.f32 1.0, %v138
  %v140 = vtanh.pop %v120
  %v141 = vmul.f32 %v139, 0.0
  %143 = vrot.lane.b32.xlu0 %v140, 64
  %v144 = vpop.permute.xlu0 %143
  %v146 = vmul.f32 %v139, %v144
  %148 = vrot.lane.b32.xlu0 %v146, 32
  %v149 = vpop.permute.xlu0 %148
  %v151 = vadd.f32 %v141, %v149
  %v152 = vtanh.pop %v151
  %154 = vrot.lane.b32.xlu0 %v152, 64
  %v155 = vpop.permute.xlu0 %154
  %v157 = vmul.f32 %v139, %v155
  %159 = vrot.lane.b32.xlu0 %v157, 32
  %v160 = vpop.permute.xlu0 %159
  %v161 = vsel %vm96, %v160, 0
  %163 = vmatpush.msra.mxu0 0.0
  %164 = vmatpush.msra.mxu0 0.0
  %165 = vmatpush.msra.mxu0 0.0
  %166 = vmatpush.msra.mxu0 0.0
  %167 = vmatpush.msra.mxu0 0.0
  %168 = vmatpush.msra.mxu0 0.0
  %169 = vmatpush.msra.mxu0 0.0
  %170 = vmatpush.msra.mxu0 0.0
  %171 = vmatpush.msra.mxu0 0.0
  %172 = vmatpush.msra.mxu0 0.0
  %173 = vmatpush.msra.mxu0 0.0
  %174 = vmatpush.msra.mxu0 0.0
  %175 = vmatpush.msra.mxu0 %v95
  %176 = vmatpush.msra.mxu0 %v94
  %177 = vmatpush.msra.mxu0 %v93
  %178 = vmatpush.msra.mxu0 %v92
  %179 = vmatmul.f32.gmra.mxu0 %v161
  %v180 = vpop.f32.mrf.mxu0
  %v181 = vadd.f32 0.0, %v180
  %182 = vdwg.mxu0
  %v183 = vadd.f32 %v72, %v181
  %v184 = vxor.u32 %v183, 2147483648
  %v185 = vmul.f32 %v184, 1.442695
  %v186 = vpow.pop %v185
  %v187 = vadd.f32 %v186, 1.0
  %v188 = vrcp.pop %v187
  %v189 = vmul.f32 %v187, %v188
  %v190 = vsub.f32 1.0, %v189
  %v191 = vmul.f32 %v188, %v190
  %v192 = vadd.f32 %v188, %v191
  %vm193 = vweird.f32 %v187
  %vm194 = vweird.f32 %v188
  %vm195 = vmor %vm193, %vm194
  %v196 = vsel %vm195, %v188, %v192
  %v197 = vand.u32 2147483647, %v187
  %vm198 = vcmp.eq.f32.partialorder %v197, 8.507059e+37
  %v199 = vand.u32 %v187, 2147483648
  %v200 = vor.u32 1.1754944e-38, %v199
  %v201 = vsel %vm198, %v200, %v196
  %v202 = vmul.f32 1.0, %v201
  %v203 = vtanh.pop %v183
  %v204 = vmul.f32 %v202, %v151
  %206 = vrot.lane.b32.xlu0 %v203, 64
  %v207 = vpop.permute.xlu0 %206
  %v209 = vmul.f32 %v202, %v207
  %211 = vrot.lane.b32.xlu0 %v209, 32
  %v212 = vpop.permute.xlu0 %211
  %v214 = vadd.f32 %v204, %v212
  %v215 = vtanh.pop %v214
  %217 = vrot.lane.b32.xlu0 %v215, 64
  %v218 = vpop.permute.xlu0 %217
  %v220 = vmul.f32 %v202, %v218
  %222 = vrot.lane.b32.xlu0 %v220, 32
  %v223 = vpop.permute.xlu0 %222
  %v224 = vsel %vm96, %v223, 0
  %226 = vmatpush.msra.mxu0 0.0
  %227 = vmatpush.msra.mxu0 0.0
  %228 = vmatpush.msra.mxu0 0.0
  %229 = vmatpush.msra.mxu0 0.0
  %230 = vmatpush.msra.mxu0 0.0
  %231 = vmatpush.msra.mxu0 0.0
  %232 = vmatpush.msra.mxu0 0.0
  %233 = vmatpush.msra.mxu0 0.0
  %234 = vmatpush.msra.mxu0 0.0
  %235 = vmatpush.msra.mxu0 0.0
  %236 = vmatpush.msra.mxu0 0.0
  %237 = vmatpush.msra.mxu0 0.0
  %238 = vmatpush.msra.mxu0 %v95
  %239 = vmatpush.msra.mxu0 %v94
  %240 = vmatpush.msra.mxu0 %v93
  %241 = vmatpush.msra.mxu0 %v92
  %242 = vmatmul.f32.gmra.mxu0 %v224
  %v243 = vpop.f32.mrf.mxu0
  %v244 = vadd.f32 0.0, %v243
  %245 = vdwg.mxu0
  %v246 = vadd.f32 %v75, %v244
  %v247 = vxor.u32 %v246, 2147483648
  %v248 = vmul.f32 %v247, 1.442695
  %v249 = vpow.pop %v248
  %v250 = vadd.f32 %v249, 1.0
  %v251 = vrcp.pop %v250
  %v252 = vmul.f32 %v250, %v251
  %v253 = vsub.f32 1.0, %v252
  %v254 = vmul.f32 %v251, %v253
  %v255 = vadd.f32 %v251, %v254
  %vm256 = vweird.f32 %v250
  %vm257 = vweird.f32 %v251
  %vm258 = vmor %vm256, %vm257
  %v259 = vsel %vm258, %v251, %v255
  %v260 = vand.u32 2147483647, %v250
  %vm261 = vcmp.eq.f32.partialorder %v260, 8.507059e+37
  %v262 = vand.u32 %v250, 2147483648
  %v263 = vor.u32 1.1754944e-38, %v262
  %v264 = vsel %vm261, %v263, %v259
  %v265 = vmul.f32 1.0, %v264
  %v266 = vtanh.pop %v246
  %v267 = vmul.f32 %v265, %v214
  %269 = vrot.lane.b32.xlu0 %v266, 64
  %v270 = vpop.permute.xlu0 %269
  %v272 = vmul.f32 %v265, %v270
  %274 = vrot.lane.b32.xlu0 %v272, 32
  %v275 = vpop.permute.xlu0 %274
  %v277 = vadd.f32 %v267, %v275
  %v278 = vtanh.pop %v277
  %280 = vrot.lane.b32.xlu0 %v278, 64
  %v281 = vpop.permute.xlu0 %280
  %v283 = vmul.f32 %v265, %v281
  %285 = vrot.lane.b32.xlu0 %v283, 32
  %v286 = vpop.permute.xlu0 %285
  %v287 = vsel %vm96, %v286, 0
  %289 = vmatpush.msra.mxu0 0.0
  %290 = vmatpush.msra.mxu0 0.0
  %291 = vmatpush.msra.mxu0 0.0
  %292 = vmatpush.msra.mxu0 0.0
  %293 = vmatpush.msra.mxu0 0.0
  %294 = vmatpush.msra.mxu0 0.0
  %295 = vmatpush.msra.mxu0 0.0
  %296 = vmatpush.msra.mxu0 0.0
  %297 = vmatpush.msra.mxu0 0.0
  %298 = vmatpush.msra.mxu0 0.0
  %299 = vmatpush.msra.mxu0 0.0
  %300 = vmatpush.msra.mxu0 0.0
  %301 = vmatpush.msra.mxu0 %v95
  %302 = vmatpush.msra.mxu0 %v94
  %303 = vmatpush.msra.mxu0 %v93
  %304 = vmatpush.msra.mxu0 %v92
  %305 = vmatmul.f32.gmra.mxu0 %v287
  %v306 = vpop.f32.mrf.mxu0
  %v307 = vadd.f32 0.0, %v306
  %308 = vdwg.mxu0
  %v309 = vadd.f32 %v78, %v307
  %v310 = vxor.u32 %v309, 2147483648
  %v311 = vmul.f32 %v310, 1.442695
  %v312 = vpow.pop %v311
  %v313 = vadd.f32 %v312, 1.0
  %v314 = vrcp.pop %v313
  %v315 = vmul.f32 %v313, %v314
  %v316 = vsub.f32 1.0, %v315
  %v317 = vmul.f32 %v314, %v316
  %v318 = vadd.f32 %v314, %v317
  %vm319 = vweird.f32 %v313
  %vm320 = vweird.f32 %v314
  %vm321 = vmor %vm319, %vm320
  %v322 = vsel %vm321, %v314, %v318
  %v323 = vand.u32 2147483647, %v313
  %vm324 = vcmp.eq.f32.partialorder %v323, 8.507059e+37
  %v325 = vand.u32 %v313, 2147483648
  %v326 = vor.u32 1.1754944e-38, %v325
  %v327 = vsel %vm324, %v326, %v322
  %v328 = vmul.f32 1.0, %v327
  %v329 = vtanh.pop %v309
  %v330 = vmul.f32 %v328, %v277
  %332 = vrot.lane.b32.xlu0 %v329, 64
  %v333 = vpop.permute.xlu0 %332
  %v335 = vmul.f32 %v328, %v333
  %337 = vrot.lane.b32.xlu0 %v335, 32
  %v338 = vpop.permute.xlu0 %337
  %v340 = vadd.f32 %v330, %v338
  %v341 = vtanh.pop %v340
  %343 = vrot.lane.b32.xlu0 %v341, 64
  %v344 = vpop.permute.xlu0 %343
  %v346 = vmul.f32 %v328, %v344
  %348 = vrot.lane.b32.xlu0 %v346, 32
  %v349 = vpop.permute.xlu0 %348
  %v350 = vsel %vm96, %v349, 0
  %352 = vmatpush.msra.mxu0 0.0
  %353 = vmatpush.msra.mxu0 0.0
  %354 = vmatpush.msra.mxu0 0.0
  %355 = vmatpush.msra.mxu0 0.0
  %356 = vmatpush.msra.mxu0 0.0
  %357 = vmatpush.msra.mxu0 0.0
  %358 = vmatpush.msra.mxu0 0.0
  %359 = vmatpush.msra.mxu0 0.0
  %360 = vmatpush.msra.mxu0 0.0
  %361 = vmatpush.msra.mxu0 0.0
  %362 = vmatpush.msra.mxu0 0.0
  %363 = vmatpush.msra.mxu0 0.0
  %364 = vmatpush.msra.mxu0 %v95
  %365 = vmatpush.msra.mxu0 %v94
  %366 = vmatpush.msra.mxu0 %v93
  %367 = vmatpush.msra.mxu0 %v92
  %368 = vmatmul.f32.gmra.mxu0 %v350
  %v369 = vpop.f32.mrf.mxu0
  %v370 = vadd.f32 0.0, %v369
  %371 = vdwg.mxu0
  %v372 = vadd.f32 %v81, %v370
  %v373 = vxor.u32 %v372, 2147483648
  %v374 = vmul.f32 %v373, 1.442695
  %v375 = vpow.pop %v374
  %v376 = vadd.f32 %v375, 1.0
  %v377 = vrcp.pop %v376
  %v378 = vmul.f32 %v376, %v377
  %v379 = vsub.f32 1.0, %v378
  %v380 = vmul.f32 %v377, %v379
  %v381 = vadd.f32 %v377, %v380
  %vm382 = vweird.f32 %v376
  %vm383 = vweird.f32 %v377
  %vm384 = vmor %vm382, %vm383
  %v385 = vsel %vm384, %v377, %v381
  %v386 = vand.u32 2147483647, %v376
  %vm387 = vcmp.eq.f32.partialorder %v386, 8.507059e+37
  %v388 = vand.u32 %v376, 2147483648
  %v389 = vor.u32 1.1754944e-38, %v388
  %v390 = vsel %vm387, %v389, %v385
  %v391 = vmul.f32 1.0, %v390
  %v392 = vtanh.pop %v372
  %v393 = vmul.f32 %v391, %v340
  %395 = vrot.lane.b32.xlu0 %v392, 64
  %v396 = vpop.permute.xlu0 %395
  %v398 = vmul.f32 %v391, %v396
  %400 = vrot.lane.b32.xlu0 %v398, 32
  %v401 = vpop.permute.xlu0 %400
  %v403 = vadd.f32 %v393, %v401
  %v404 = vtanh.pop %v403
  %406 = vrot.lane.b32.xlu0 %v404, 64
  %v407 = vpop.permute.xlu0 %406
  %v409 = vmul.f32 %v391, %v407
  %411 = vrot.lane.b32.xlu0 %v409, 32
  %v412 = vpop.permute.xlu0 %411
  %v413 = vsel %vm96, %v412, 0
  %415 = vmatpush.msra.mxu0 0.0
  %416 = vmatpush.msra.mxu0 0.0
  %417 = vmatpush.msra.mxu0 0.0
  %418 = vmatpush.msra.mxu0 0.0
  %419 = vmatpush.msra.mxu0 0.0
  %420 = vmatpush.msra.mxu0 0.0
  %421 = vmatpush.msra.mxu0 0.0
  %422 = vmatpush.msra.mxu0 0.0
  %423 = vmatpush.msra.mxu0 0.0
  %424 = vmatpush.msra.mxu0 0.0
  %425 = vmatpush.msra.mxu0 0.0
  %426 = vmatpush.msra.mxu0 0.0
  %427 = vmatpush.msra.mxu0 %v95
  %428 = vmatpush.msra.mxu0 %v94
  %429 = vmatpush.msra.mxu0 %v93
  %430 = vmatpush.msra.mxu0 %v92
  %431 = vmatmul.f32.gmra.mxu0 %v413
  %v432 = vpop.f32.mrf.mxu0
  %v433 = vadd.f32 0.0, %v432
  %434 = vdwg.mxu0
  %v435 = vadd.f32 %v84, %v433
  %v436 = vxor.u32 %v435, 2147483648
  %v437 = vmul.f32 %v436, 1.442695
  %v438 = vpow.pop %v437
  %v439 = vadd.f32 %v438, 1.0
  %v440 = vrcp.pop %v439
  %v441 = vmul.f32 %v439, %v440
  %v442 = vsub.f32 1.0, %v441
  %v443 = vmul.f32 %v440, %v442
  %v444 = vadd.f32 %v440, %v443
  %vm445 = vweird.f32 %v439
  %vm446 = vweird.f32 %v440
  %vm447 = vmor %vm445, %vm446
  %v448 = vsel %vm447, %v440, %v444
  %v449 = vand.u32 2147483647, %v439
  %vm450 = vcmp.eq.f32.partialorder %v449, 8.507059e+37
  %v451 = vand.u32 %v439, 2147483648
  %v452 = vor.u32 1.1754944e-38, %v451
  %v453 = vsel %vm450, %v452, %v448
  %v454 = vmul.f32 1.0, %v453
  %v455 = vtanh.pop %v435
  %v456 = vmul.f32 %v454, %v403
  %458 = vrot.lane.b32.xlu0 %v455, 64
  %v459 = vpop.permute.xlu0 %458
  %v461 = vmul.f32 %v454, %v459
  %463 = vrot.lane.b32.xlu0 %v461, 32
  %v464 = vpop.permute.xlu0 %463
  %v466 = vadd.f32 %v456, %v464
  %v467 = vtanh.pop %v466
  %469 = vrot.lane.b32.xlu0 %v467, 64
  %v470 = vpop.permute.xlu0 %469
  %v472 = vmul.f32 %v454, %v470
  %474 = vrot.lane.b32.xlu0 %v472, 32
  %v475 = vpop.permute.xlu0 %474
  %v476 = vsel %vm96, %v475, 0
  %478 = vmatpush.msra.mxu0 0.0
  %479 = vmatpush.msra.mxu0 0.0
  %480 = vmatpush.msra.mxu0 0.0
  %481 = vmatpush.msra.mxu0 0.0
  %482 = vmatpush.msra.mxu0 0.0
  %483 = vmatpush.msra.mxu0 0.0
  %484 = vmatpush.msra.mxu0 0.0
  %485 = vmatpush.msra.mxu0 0.0
  %486 = vmatpush.msra.mxu0 0.0
  %487 = vmatpush.msra.mxu0 0.0
  %488 = vmatpush.msra.mxu0 0.0
  %489 = vmatpush.msra.mxu0 0.0
  %490 = vmatpush.msra.mxu0 %v95
  %491 = vmatpush.msra.mxu0 %v94
  %492 = vmatpush.msra.mxu0 %v93
  %493 = vmatpush.msra.mxu0 %v92
  %494 = vmatmul.f32.gmra.mxu0 %v476
  %v495 = vpop.f32.mrf.mxu0
  %v496 = vadd.f32 0.0, %v495
  %497 = vdwg.mxu0
  %v498 = vadd.f32 %v87, %v496
  %v499 = vxor.u32 %v498, 2147483648
  %v500 = vmul.f32 %v499, 1.442695
  %v501 = vpow.pop %v500
  %v502 = vadd.f32 %v501, 1.0
  %v503 = vrcp.pop %v502
  %v504 = vmul.f32 %v502, %v503
  %v505 = vsub.f32 1.0, %v504
  %v506 = vmul.f32 %v503, %v505
  %v507 = vadd.f32 %v503, %v506
  %vm508 = vweird.f32 %v502
  %vm509 = vweird.f32 %v503
  %vm510 = vmor %vm508, %vm509
  %v511 = vsel %vm510, %v503, %v507
  %v512 = vand.u32 2147483647, %v502
  %vm513 = vcmp.eq.f32.partialorder %v512, 8.507059e+37
  %v514 = vand.u32 %v502, 2147483648
  %v515 = vor.u32 1.1754944e-38, %v514
  %v516 = vsel %vm513, %v515, %v511
  %v517 = vmul.f32 1.0, %v516
  %v518 = vtanh.pop %v498
  %v519 = vmul.f32 %v517, %v466
  %521 = vrot.lane.b32.xlu0 %v518, 64
  %v522 = vpop.permute.xlu0 %521
  %v524 = vmul.f32 %v517, %v522
  %526 = vrot.lane.b32.xlu0 %v524, 32
  %v527 = vpop.permute.xlu0 %526
  %v529 = vadd.f32 %v519, %v527
  %v530 = vtanh.pop %v529
  %532 = vrot.lane.b32.xlu0 %v530, 64
  %v533 = vpop.permute.xlu0 %532
  %v535 = vmul.f32 %v517, %v533
  %537 = vrot.lane.b32.xlu0 %v535, 32
  %v538 = vpop.permute.xlu0 %537
  %v539 = vsel %vm96, %v538, 0
  %541 = vmatpush.msra.mxu0 0.0
  %542 = vmatpush.msra.mxu0 0.0
  %543 = vmatpush.msra.mxu0 0.0
  %544 = vmatpush.msra.mxu0 0.0
  %545 = vmatpush.msra.mxu0 0.0
  %546 = vmatpush.msra.mxu0 0.0
  %547 = vmatpush.msra.mxu0 0.0
  %548 = vmatpush.msra.mxu0 0.0
  %549 = vmatpush.msra.mxu0 0.0
  %550 = vmatpush.msra.mxu0 0.0
  %551 = vmatpush.msra.mxu0 0.0
  %552 = vmatpush.msra.mxu0 0.0
  %553 = vmatpush.msra.mxu0 %v95
  %554 = vmatpush.msra.mxu0 %v94
  %555 = vmatpush.msra.mxu0 %v93
  %556 = vmatpush.msra.mxu0 %v92
  %557 = vmatmul.f32.gmra.mxu0 %v539
  %v558 = vpop.f32.mrf.mxu0
  %v559 = vadd.f32 0.0, %v558
  %560 = vdwg.mxu0
  %v561 = vadd.f32 %v90, %v559
  %v562 = vxor.u32 %v561, 2147483648
  %v563 = vmul.f32 %v562, 1.442695
  %v564 = vpow.pop %v563
  %v565 = vadd.f32 %v564, 1.0
  %v566 = vrcp.pop %v565
  %v567 = vmul.f32 %v565, %v566
  %v568 = vsub.f32 1.0, %v567
  %v569 = vmul.f32 %v566, %v568
  %v570 = vadd.f32 %v566, %v569
  %vm571 = vweird.f32 %v565
  %vm572 = vweird.f32 %v566
  %vm573 = vmor %vm571, %vm572
  %v574 = vsel %vm573, %v566, %v570
  %v575 = vand.u32 2147483647, %v565
  %vm576 = vcmp.eq.f32.partialorder %v575, 8.507059e+37
  %v577 = vand.u32 %v565, 2147483648
  %v578 = vor.u32 1.1754944e-38, %v577
  %v579 = vsel %vm576, %v578, %v574
  %v580 = vmul.f32 1.0, %v579
  %v581 = vtanh.pop %v561
  %v582 = vmul.f32 %v580, %v529
  %584 = vrot.lane.b32.xlu0 %v581, 64
  %v585 = vpop.permute.xlu0 %584
  %v587 = vmul.f32 %v580, %v585
  %589 = vrot.lane.b32.xlu0 %v587, 32
  %v590 = vpop.permute.xlu0 %589
  %v592 = vadd.f32 %v582, %v590
  %v593 = vtanh.pop %v592
  %595 = vrot.lane.b32.xlu0 %v593, 64
  %v596 = vpop.permute.xlu0 %595
  %v598 = vmul.f32 %v580, %v596
  %v599 = vld [vmem:[%s4] sm:$0xff]
  %v600 = vld [vmem:[%s4 + $0x8] sm:$0xff]
  %v601 = vld [vmem:[%s4 + $0x10] sm:$0xff]
  %v602 = vld [vmem:[%s4 + $0x18] sm:$0xff]
  %v603 = vld [vmem:[%s5] sm:$0x1]
  %v605 = vperm.slane %v603, 0
  %608 = vrot.lane.b32.xlu0 %v598, 32
  %v609 = vpop.permute.xlu0 %608
  %v610 = vsel %vm96, %v609, 0
  %612 = vmatpush.msra.mxu0 0.0
  %613 = vmatpush.msra.mxu0 0.0
  %614 = vmatpush.msra.mxu0 0.0
  %615 = vmatpush.msra.mxu0 0.0
  %616 = vmatpush.msra.mxu0 0.0
  %617 = vmatpush.msra.mxu0 0.0
  %618 = vmatpush.msra.mxu0 0.0
  %619 = vmatpush.msra.mxu0 0.0
  %620 = vmatpush.msra.mxu0 0.0
  %621 = vmatpush.msra.mxu0 0.0
  %622 = vmatpush.msra.mxu0 0.0
  %623 = vmatpush.msra.mxu0 0.0
  %624 = vmatpush.msra.mxu0 %v602
  %625 = vmatpush.msra.mxu0 %v601
  %626 = vmatpush.msra.mxu0 %v600
  %627 = vmatpush.msra.mxu0 %v599
  %628 = vmatmul.f32.gmra.mxu0 %v610
  %v629 = vpop.f32.mrf.mxu0
  %v630 = vadd.f32 %v605, %v629
  %631 = vdwg.mxu0
  %632 = vst [vmem:[%s6] sm:$0xff] %v630
  // Predicated region
  $region26: #{video_rnn_forward.1} parent=0 // pred_check
    _
  $region27: #{video_rnn_forward.1} parent=0 // pred_check_branch
    %634 = sbr.rel (0) target = $region29
  $region28: #{video_rnn_forward.1} parent=0 // pred_region
    _
  $region29: #{video_rnn_forward.1} parent=0 // pred_fallthru
    _
  // Predicated region
  $region30: #{video_rnn_forward.1} parent=0 // pred_check
    _
  $region31: #{video_rnn_forward.1} parent=0 // pred_check_branch
    %636 = sbr.rel (0) target = $region33
  $region32: #{video_rnn_forward.1} parent=0 // pred_region
    _
  $region33: #{video_rnn_forward.1} parent=0 // pred_fallthru
    _

</llo_original>
